<compile_context>
chip_gen: v7x
topology: tpu7x:2x2x1
jax: 0.10.0
libtpu: 0.0.40
codegen_flags: <defaults>
</compile_context>

<pallas_src>
import jax
import jax.numpy as jnp
from jax.experimental import pallas as pl
from jax.experimental.pallas import tpu as pltpu

NEG_SLOPE = 0.01  # torch.nn.functional.leaky_relu default


def _leaky_relu(x):
    return jnp.where(x >= 0, x, NEG_SLOPE * x)


def _epic_proj_kernel(
    xl_ref, xg_ref, mask_ref, pool_ref,
    w0_ref, b0_ref,
    wg0m_ref, wg0s_ref, wg0g_ref, bg0_ref,
    wg1_ref, bg1_ref,
    wg2_ref, bg2_ref,
    out_local_ref, out_global_ref,
):
    xl = xl_ref[...]                                # (B*N, Dl), input dtype
    m = mask_ref[...].astype(jnp.float32)           # (B*N, 1)
    xg = xg_ref[...]                                # (B, G)
    P = pool_ref[...]                               # (B, B*N) block-selection

    # local_0 + leaky_relu (f32 MXU accumulation)
    h = _leaky_relu(
        jnp.dot(xl, w0_ref[...], preferred_element_type=jnp.float32)
        + b0_ref[...]
    )                                               # (B*N, H) f32
    hm = h * m                                      # masked local features
    out_local_ref[...] = hm.astype(out_local_ref.dtype)

    # pooling_fn: per-example masked sum / mean via block-selection matmuls
    s = jnp.dot(P, hm, preferred_element_type=jnp.float32)   # (B, H) sums
    n = jnp.dot(P, m, preferred_element_type=jnp.float32)    # (B, 1) counts
    inv_n = pl.reciprocal(n, approx=False)                   # (B, 1)

    # global_0 on concat([mean, sum, x_global]), decomposed; the mean branch
    # is folded as inv_n * dot(s, Wm) since mean = s * inv_n.
    g0 = _leaky_relu(
        jnp.dot(s, wg0m_ref[...], preferred_element_type=jnp.float32) * inv_n
        + jnp.dot(s, wg0s_ref[...], preferred_element_type=jnp.float32)
        + jnp.dot(xg, wg0g_ref[...], preferred_element_type=jnp.float32)
        + bg0_ref[...]
    )                                               # (B, H)
    g1 = _leaky_relu(
        jnp.dot(g0, wg1_ref[...], preferred_element_type=jnp.float32)
        + bg1_ref[...]
    )                                               # (B, H)
    g2 = _leaky_relu(
        jnp.dot(g1, wg2_ref[...], preferred_element_type=jnp.float32)
        + bg2_ref[...]
    )                                               # (B, Hg)
    out_global_ref[...] = g2.astype(out_global_ref.dtype)


def _weight_norm(v, g):
    # torch weight_norm, dim=0: per-output-row normalization over input dim
    norm = jnp.sqrt(jnp.sum(v * v, axis=1, keepdims=True))
    return g.reshape(-1, 1) * v / norm


@jax.jit
def epic_projection(x_local, x_global, mask, params):
    b, N, Dl = x_local.shape
    G = x_global.shape[1]
    H = params["local_0_v"].shape[0]
    Hg = params["global_2_v"].shape[0]
    cdtype = x_local.dtype

    # ---- batch blocking (amortize per-grid-step overhead, fill MXU) --------
    if b <= 16:
        B_BLK = b                      # one grid step covers the whole batch
    else:
        B_BLK = 16                     # multiple of 8 -> sublane-aligned blocks
    nb = -(-b // B_BLK)
    b_pad = nb * B_BLK

    if b_pad != b:
        pad_b = b_pad - b
        x_local = jnp.concatenate(
            [x_local, jnp.zeros((pad_b, N, Dl), x_local.dtype)], axis=0)
        x_global = jnp.concatenate(
            [x_global, jnp.zeros((pad_b, G), x_global.dtype)], axis=0)
        # pad mask with ones so padded rows stay finite (discarded afterwards)
        mask = jnp.concatenate(
            [mask, jnp.ones((pad_b, N, 1), mask.dtype)], axis=0)

    BN = B_BLK * N
    xl_flat = x_local.reshape(b_pad * N, Dl)      # free XLA reshape
    m_flat = mask.reshape(b_pad * N, 1)

    # block-selection pooling matrix: P[i, j] = 1 iff point j belongs to the
    # i-th example inside a batch block
    P = (jnp.arange(BN)[None, :] // N == jnp.arange(B_BLK)[:, None]
         ).astype(jnp.float32)                    # (B_BLK, BN)

    # ---- weight-normalized weights (glue, plain JAX) -----------------------
    w0 = _weight_norm(params["local_0_v"], params["local_0_g"])       # (H, Dl)
    wg0 = _weight_norm(params["global_0_v"], params["global_0_g"])    # (H, 2H+G)
    wg1 = _weight_norm(params["global_1_v"], params["global_1_g"])    # (H, H)
    wg2 = _weight_norm(params["global_2_v"], params["global_2_g"])    # (Hg, H)

    # pre-transpose to (in, out); split global_0 along its concat input axis
    w0_t = w0.T.astype(cdtype)                    # (Dl, H) -- matmul LHS dtype
    wg0m_t = wg0[:, :H].T.astype(jnp.float32)     # (H, H)   mean branch
    wg0s_t = wg0[:, H:2 * H].T.astype(jnp.float32)  # (H, H)  sum branch
    wg0g_t = wg0[:, 2 * H:].T.astype(jnp.float32)   # (G, H)  x_global branch
    wg1_t = wg1.T.astype(jnp.float32)             # (H, H)
    wg2_t = wg2.T.astype(jnp.float32)             # (H, Hg)

    b0 = params["local_0_b"].reshape(1, H).astype(jnp.float32)
    bg0 = params["global_0_b"].reshape(1, H).astype(jnp.float32)
    bg1 = params["global_1_b"].reshape(1, H).astype(jnp.float32)
    bg2 = params["global_2_b"].reshape(1, Hg).astype(jnp.float32)

    # ---- cost estimate (scheduler hint) ------------------------------------
    flops = int(
        2 * b_pad * N * Dl * H                    # local_0
        + 2 * nb * B_BLK * BN * (H + 1)           # pooling matmuls
        + 2 * b_pad * H * H * 2                   # global_0 mean + sum
        + 2 * b_pad * G * H                       # global_0 x_global branch
        + 2 * b_pad * H * H                       # global_1
        + 2 * b_pad * H * Hg                      # global_2
    )
    itemsize = jnp.dtype(cdtype).itemsize
    bytes_accessed = int(
        b_pad * N * Dl * itemsize                 # x_local in
        + b_pad * N * 4                           # mask in (f32)
        + b_pad * G * jnp.dtype(x_global.dtype).itemsize
        + b_pad * N * H * itemsize                # out_local
        + b_pad * Hg * jnp.dtype(x_global.dtype).itemsize
        + 4 * (Dl * H + 3 * H * H + G * H + H * Hg + 3 * H + Hg + B_BLK * BN)
    )
    cost = pl.CostEstimate(flops=flops, transcendentals=int(b_pad),
                           bytes_accessed=bytes_accessed)

    full = lambda shape: pl.BlockSpec(shape, lambda i: (0,) * len(shape))

    out_local_flat, out_global_pad = pl.pallas_call(
        _epic_proj_kernel,
        out_shape=(
            jax.ShapeDtypeStruct((b_pad * N, H), x_local.dtype),
            jax.ShapeDtypeStruct((b_pad, Hg), x_global.dtype),
        ),
        grid=(nb,),
        in_specs=[
            pl.BlockSpec((BN, Dl), lambda i: (i, 0)),       # x_local (flat)
            pl.BlockSpec((B_BLK, G), lambda i: (i, 0)),     # x_global
            pl.BlockSpec((BN, 1), lambda i: (i, 0)),        # mask (flat)
            full((B_BLK, BN)),                              # pooling matrix
            full((Dl, H)), full((1, H)),                    # local_0
            full((H, H)), full((H, H)), full((G, H)), full((1, H)),  # global_0
            full((H, H)), full((1, H)),                     # global_1
            full((H, Hg)), full((1, Hg)),                   # global_2
        ],
        out_specs=[
            pl.BlockSpec((BN, H), lambda i: (i, 0)),        # x_local out
            pl.BlockSpec((B_BLK, Hg), lambda i: (i, 0)),    # x_global out
        ],
        compiler_params=pltpu.CompilerParams(
            dimension_semantics=("parallel",),              # independent blocks
        ),
        cost_estimate=cost,
    )(
        xl_flat, x_global, m_flat, P,
        w0_t, b0,
        wg0m_t, wg0s_t, wg0g_t, bg0,
        wg1_t, bg1,
        wg2_t, bg2,
    )

    out_local = out_local_flat.reshape(b_pad, N, H)[:b]
    out_global = out_global_pad[:b]
    return out_local, out_global


# ---------------- pure-JAX reference (for correctness check) ----------------
def _ref_forward(x_local, x_global, mask, params):
    w0 = _weight_norm(params["local_0_v"], params["local_0_g"])
    wg0 = _weight_norm(params["global_0_v"], params["global_0_g"])
    wg1 = _weight_norm(params["global_1_v"], params["global_1_g"])
    wg2 = _weight_norm(params["global_2_v"], params["global_2_g"])

    h = _leaky_relu(jnp.einsum("bnd,hd->bnh", x_local, w0) + params["local_0_b"])
    s = jnp.sum(h * mask, axis=1)                     # (b, H)
    mean = s / jnp.sum(mask, axis=1)                  # (b, H) / (b, 1)
    pooled = jnp.concatenate([mean, s, x_global], axis=1)
    g0 = _leaky_relu(pooled @ wg0.T + params["global_0_b"])
    g1 = _leaky_relu(g0 @ wg1.T + params["global_1_b"])
    g2 = _leaky_relu(g1 @ wg2.T + params["global_2_b"])
    return h * mask, g2


# ---------------------------------------------------------------------------
if __name__ == "__main__":
    # Small shapes consistent with the module
    b, N = 2, 8
    dim_local, dim_global = 4, 8
    dim_hidden_local, dim_hidden_global = 32, 16

    key = jax.random.PRNGKey(0)
    keys = jax.random.split(key, 16)

    def linear_params(kv, kg, kb, out_dim, in_dim):
        bound = 1.0 / (in_dim ** 0.5)
        v = jax.random.uniform(kv, (out_dim, in_dim), jnp.float32, -bound, bound)
        # torch weight_norm init: g = ||v|| per output row -> w == v at init,
        # but we perturb g so the normalization path is actually exercised.
        g = jnp.sqrt(jnp.sum(v * v, axis=1)) * (
            1.0 + 0.1 * jax.random.normal(kg, (out_dim,), jnp.float32)
        )
        bias = jax.random.uniform(kb, (out_dim,), jnp.float32, -bound, bound)
        return v, g, bias

    l0_v, l0_g, l0_b = linear_params(keys[0], keys[1], keys[2],
                                     dim_hidden_local, dim_local)
    g0_v, g0_g, g0_b = linear_params(keys[3], keys[4], keys[5],
                                     dim_hidden_local,
                                     2 * dim_hidden_local + dim_global)
    g1_v, g1_g, g1_b = linear_params(keys[6], keys[7], keys[8],
                                     dim_hidden_local, dim_hidden_local)
    g2_v, g2_g, g2_b = linear_params(keys[9], keys[10], keys[11],
                                     dim_hidden_global, dim_hidden_local)

    params = dict(
        local_0_v=l0_v, local_0_g=l0_g, local_0_b=l0_b,
        global_0_v=g0_v, global_0_g=g0_g, global_0_b=g0_b,
        global_1_v=g1_v, global_1_g=g1_g, global_1_b=g1_b,
        global_2_v=g2_v, global_2_g=g2_g, global_2_b=g2_b,
    )

    x_local = jax.random.normal(keys[12], (b, N, dim_local), jnp.float32)
    x_global = jax.random.normal(keys[13], (b, dim_global), jnp.float32)
    # variable-length 0/1 mask, at least one valid point per example
    lengths = jnp.array([N, N - 3], dtype=jnp.int32)
    mask = (jnp.arange(N)[None, :] < lengths[:, None]).astype(jnp.float32)
    mask = mask[:, :, None]  # (b, N, 1)

    out_local, out_global = epic_projection(x_local, x_global, mask, params)
    jax.block_until_ready((out_local, out_global))

    ref_local, ref_global = _ref_forward(x_local, x_global, mask, params)
    assert out_local.shape == (b, N, dim_hidden_local)
    assert out_global.shape == (b, dim_hidden_global)
    assert jnp.allclose(out_local, ref_local, atol=1e-5, rtol=1e-5)
    assert jnp.allclose(out_global, ref_global, atol=1e-5, rtol=1e-5)

    print("KERNEL_OK")
</pallas_src>

<mosaic_0001>
module attributes {stable_mosaic.version = 11 : i64} {
  func.func @_epic_proj_kernel(%arg0: i32, %arg1: memref<16x4xf32, #tpu.memory_space<vmem>>, %arg2: memref<2x8xf32, #tpu.memory_space<vmem>>, %arg3: memref<16x1xf32, #tpu.memory_space<vmem>>, %arg4: memref<2x16xf32, #tpu.memory_space<vmem>>, %arg5: memref<4x32xf32, #tpu.memory_space<vmem>>, %arg6: memref<1x32xf32, #tpu.memory_space<vmem>>, %arg7: memref<32x32xf32, #tpu.memory_space<vmem>>, %arg8: memref<32x32xf32, #tpu.memory_space<vmem>>, %arg9: memref<8x32xf32, #tpu.memory_space<vmem>>, %arg10: memref<1x32xf32, #tpu.memory_space<vmem>>, %arg11: memref<32x32xf32, #tpu.memory_space<vmem>>, %arg12: memref<1x32xf32, #tpu.memory_space<vmem>>, %arg13: memref<32x16xf32, #tpu.memory_space<vmem>>, %arg14: memref<1x16xf32, #tpu.memory_space<vmem>>, %arg15: memref<16x32xf32, #tpu.memory_space<vmem>>, %arg16: memref<2x16xf32, #tpu.memory_space<vmem>>) attributes {dimension_semantics = [#tpu.dimension_semantics<parallel>], iteration_bounds = array<i64: 1>, scalar_prefetch = 0 : i64, scratch_operands = 0 : i64, tpu.core_type = #tpu.core_type<tc>, window_params = [{transform_indices = @transform_0, window_bounds = array<i64: 16, 4>}, {transform_indices = @transform_1, window_bounds = array<i64: 2, 8>}, {transform_indices = @transform_2, window_bounds = array<i64: 16, 1>}, {pipeline_mode = #tpu.pipeline_mode<synchronous>, transform_indices = @transform_3, window_bounds = array<i64: 2, 16>}, {pipeline_mode = #tpu.pipeline_mode<synchronous>, transform_indices = @transform_4, window_bounds = array<i64: 4, 32>}, {pipeline_mode = #tpu.pipeline_mode<synchronous>, transform_indices = @transform_5, window_bounds = array<i64: 1, 32>}, {pipeline_mode = #tpu.pipeline_mode<synchronous>, transform_indices = @transform_6, window_bounds = array<i64: 32, 32>}, {pipeline_mode = #tpu.pipeline_mode<synchronous>, transform_indices = @transform_7, window_bounds = array<i64: 32, 32>}, {pipeline_mode = #tpu.pipeline_mode<synchronous>, transform_indices = @transform_8, window_bounds = array<i64: 8, 32>}, {pipeline_mode = #tpu.pipeline_mode<synchronous>, transform_indices = @transform_9, window_bounds = array<i64: 1, 32>}, {pipeline_mode = #tpu.pipeline_mode<synchronous>, transform_indices = @transform_10, window_bounds = array<i64: 32, 32>}, {pipeline_mode = #tpu.pipeline_mode<synchronous>, transform_indices = @transform_11, window_bounds = array<i64: 1, 32>}, {pipeline_mode = #tpu.pipeline_mode<synchronous>, transform_indices = @transform_12, window_bounds = array<i64: 32, 16>}, {pipeline_mode = #tpu.pipeline_mode<synchronous>, transform_indices = @transform_13, window_bounds = array<i64: 1, 16>}, {transform_indices = @transform_14, window_bounds = array<i64: 16, 32>}, {transform_indices = @transform_15, window_bounds = array<i64: 2, 16>}]} {
    %c0 = arith.constant 0 : index
    %c0_0 = arith.constant 0 : index
    %0 = vector.load %arg1[%c0, %c0_0] : memref<16x4xf32, #tpu.memory_space<vmem>>, vector<16x4xf32>
    %c0_1 = arith.constant 0 : index
    %c0_2 = arith.constant 0 : index
    %1 = vector.load %arg3[%c0_1, %c0_2] : memref<16x1xf32, #tpu.memory_space<vmem>>, vector<16x1xf32>
    %c0_3 = arith.constant 0 : index
    %c0_4 = arith.constant 0 : index
    %2 = vector.load %arg2[%c0_3, %c0_4] : memref<2x8xf32, #tpu.memory_space<vmem>>, vector<2x8xf32>
    %c0_5 = arith.constant 0 : index
    %c0_6 = arith.constant 0 : index
    %3 = vector.load %arg4[%c0_5, %c0_6] : memref<2x16xf32, #tpu.memory_space<vmem>>, vector<2x16xf32>
    %c0_7 = arith.constant 0 : index
    %c0_8 = arith.constant 0 : index
    %4 = vector.load %arg5[%c0_7, %c0_8] : memref<4x32xf32, #tpu.memory_space<vmem>>, vector<4x32xf32>
    %cst = arith.constant dense<0.000000e+00> : vector<16x32xf32>
    %5 = tpu.matmul %0, %4, %cst {dimension_numbers = #tpu.dot_dimension_numbers<[1], [0], [0], [1], [0, 0, 1, 1], [], []>} : vector<16x4xf32>, vector<4x32xf32>, vector<16x32xf32> -> vector<16x32xf32>
    %c0_9 = arith.constant 0 : index
    %c0_10 = arith.constant 0 : index
    %6 = vector.load %arg6[%c0_9, %c0_10] : memref<1x32xf32, #tpu.memory_space<vmem>>, vector<1x32xf32>
    %7 = vector.broadcast %6 : vector<1x32xf32> to vector<16x32xf32>
    %8 = arith.addf %5, %7 : vector<16x32xf32>
    %cst_11 = arith.constant 0.000000e+00 : f32
    %9 = vector.broadcast %cst_11 : f32 to vector<16x32xf32>
    %10 = arith.cmpf oge, %8, %9 : vector<16x32xf32>
    %cst_12 = arith.constant 0.00999999977 : f32
    %11 = vector.broadcast %cst_12 : f32 to vector<16x32xf32>
    %12 = arith.mulf %11, %8 : vector<16x32xf32>
    %13 = arith.select %10, %8, %12 : vector<16x32xi1>, vector<16x32xf32>
    %14 = vector.broadcast %1 : vector<16x1xf32> to vector<16x32xf32>
    %15 = arith.mulf %13, %14 : vector<16x32xf32>
    %c0_13 = arith.constant 0 : index
    %c0_14 = arith.constant 0 : index
    %16 = vector.load %arg15[%c0_13, %c0_14] : memref<16x32xf32, #tpu.memory_space<vmem>>, vector<16x32xf32>
    tpu.vector_store %arg15[%c0_13, %c0_14], %15 {strides = array<i32>} : memref<16x32xf32, #tpu.memory_space<vmem>>, vector<16x32xf32>,
    %cst_15 = arith.constant dense<0.000000e+00> : vector<2x32xf32>
    %17 = tpu.matmul %3, %15, %cst_15 {dimension_numbers = #tpu.dot_dimension_numbers<[1], [0], [0], [1], [0, 0, 1, 1], [], []>} : vector<2x16xf32>, vector<16x32xf32>, vector<2x32xf32> -> vector<2x32xf32>
    %cst_16 = arith.constant dense<0.000000e+00> : vector<2x1xf32>
    %18 = tpu.matmul %3, %1, %cst_16 {dimension_numbers = #tpu.dot_dimension_numbers<[1], [0], [0], [1], [0, 0, 1, 1], [], []>} : vector<2x16xf32>, vector<16x1xf32>, vector<2x1xf32> -> vector<2x1xf32>
    %19 = tpu.reciprocal %18 : vector<2x1xf32> -> vector<2x1xf32>
    %c0_17 = arith.constant 0 : index
    %c0_18 = arith.constant 0 : index
    %20 = vector.load %arg7[%c0_17, %c0_18] : memref<32x32xf32, #tpu.memory_space<vmem>>, vector<32x32xf32>
    %cst_19 = arith.constant dense<0.000000e+00> : vector<2x32xf32>
    %21 = tpu.matmul %17, %20, %cst_19 {dimension_numbers = #tpu.dot_dimension_numbers<[1], [0], [0], [1], [0, 0, 1, 1], [], []>} : vector<2x32xf32>, vector<32x32xf32>, vector<2x32xf32> -> vector<2x32xf32>
    %22 = vector.broadcast %19 : vector<2x1xf32> to vector<2x32xf32>
    %23 = arith.mulf %21, %22 : vector<2x32xf32>
    %c0_20 = arith.constant 0 : index
    %c0_21 = arith.constant 0 : index
    %24 = vector.load %arg8[%c0_20, %c0_21] : memref<32x32xf32, #tpu.memory_space<vmem>>, vector<32x32xf32>
    %cst_22 = arith.constant dense<0.000000e+00> : vector<2x32xf32>
    %25 = tpu.matmul %17, %24, %cst_22 {dimension_numbers = #tpu.dot_dimension_numbers<[1], [0], [0], [1], [0, 0, 1, 1], [], []>} : vector<2x32xf32>, vector<32x32xf32>, vector<2x32xf32> -> vector<2x32xf32>
    %26 = arith.addf %23, %25 : vector<2x32xf32>
    %c0_23 = arith.constant 0 : index
    %c0_24 = arith.constant 0 : index
    %27 = vector.load %arg9[%c0_23, %c0_24] : memref<8x32xf32, #tpu.memory_space<vmem>>, vector<8x32xf32>
    %cst_25 = arith.constant dense<0.000000e+00> : vector<2x32xf32>
    %28 = tpu.matmul %2, %27, %cst_25 {dimension_numbers = #tpu.dot_dimension_numbers<[1], [0], [0], [1], [0, 0, 1, 1], [], []>} : vector<2x8xf32>, vector<8x32xf32>, vector<2x32xf32> -> vector<2x32xf32>
    %29 = arith.addf %26, %28 : vector<2x32xf32>
    %c0_26 = arith.constant 0 : index
    %c0_27 = arith.constant 0 : index
    %30 = vector.load %arg10[%c0_26, %c0_27] : memref<1x32xf32, #tpu.memory_space<vmem>>, vector<1x32xf32>
    %31 = vector.broadcast %30 : vector<1x32xf32> to vector<2x32xf32>
    %32 = arith.addf %29, %31 : vector<2x32xf32>
    %cst_28 = arith.constant 0.000000e+00 : f32
    %33 = vector.broadcast %cst_28 : f32 to vector<2x32xf32>
    %34 = arith.cmpf oge, %32, %33 : vector<2x32xf32>
    %cst_29 = arith.constant 0.00999999977 : f32
    %35 = vector.broadcast %cst_29 : f32 to vector<2x32xf32>
    %36 = arith.mulf %35, %32 : vector<2x32xf32>
    %37 = arith.select %34, %32, %36 : vector<2x32xi1>, vector<2x32xf32>
    %c0_30 = arith.constant 0 : index
    %c0_31 = arith.constant 0 : index
    %38 = vector.load %arg11[%c0_30, %c0_31] : memref<32x32xf32, #tpu.memory_space<vmem>>, vector<32x32xf32>
    %cst_32 = arith.constant dense<0.000000e+00> : vector<2x32xf32>
    %39 = tpu.matmul %37, %38, %cst_32 {dimension_numbers = #tpu.dot_dimension_numbers<[1], [0], [0], [1], [0, 0, 1, 1], [], []>} : vector<2x32xf32>, vector<32x32xf32>, vector<2x32xf32> -> vector<2x32xf32>
    %c0_33 = arith.constant 0 : index
    %c0_34 = arith.constant 0 : index
    %40 = vector.load %arg12[%c0_33, %c0_34] : memref<1x32xf32, #tpu.memory_space<vmem>>, vector<1x32xf32>
    %41 = vector.broadcast %40 : vector<1x32xf32> to vector<2x32xf32>
    %42 = arith.addf %39, %41 : vector<2x32xf32>
    %cst_35 = arith.constant 0.000000e+00 : f32
    %43 = vector.broadcast %cst_35 : f32 to vector<2x32xf32>
    %44 = arith.cmpf oge, %42, %43 : vector<2x32xf32>
    %cst_36 = arith.constant 0.00999999977 : f32
    %45 = vector.broadcast %cst_36 : f32 to vector<2x32xf32>
    %46 = arith.mulf %45, %42 : vector<2x32xf32>
    %47 = arith.select %44, %42, %46 : vector<2x32xi1>, vector<2x32xf32>
    %c0_37 = arith.constant 0 : index
    %c0_38 = arith.constant 0 : index
    %48 = vector.load %arg13[%c0_37, %c0_38] : memref<32x16xf32, #tpu.memory_space<vmem>>, vector<32x16xf32>
    %cst_39 = arith.constant dense<0.000000e+00> : vector<2x16xf32>
    %49 = tpu.matmul %47, %48, %cst_39 {dimension_numbers = #tpu.dot_dimension_numbers<[1], [0], [0], [1], [0, 0, 1, 1], [], []>} : vector<2x32xf32>, vector<32x16xf32>, vector<2x16xf32> -> vector<2x16xf32>
    %c0_40 = arith.constant 0 : index
    %c0_41 = arith.constant 0 : index
    %50 = vector.load %arg14[%c0_40, %c0_41] : memref<1x16xf32, #tpu.memory_space<vmem>>, vector<1x16xf32>
    %51 = vector.broadcast %50 : vector<1x16xf32> to vector<2x16xf32>
    %52 = arith.addf %49, %51 : vector<2x16xf32>
    %cst_42 = arith.constant 0.000000e+00 : f32
    %53 = vector.broadcast %cst_42 : f32 to vector<2x16xf32>
    %54 = arith.cmpf oge, %52, %53 : vector<2x16xf32>
    %cst_43 = arith.constant 0.00999999977 : f32
    %55 = vector.broadcast %cst_43 : f32 to vector<2x16xf32>
    %56 = arith.mulf %55, %52 : vector<2x16xf32>
    %57 = arith.select %54, %52, %56 : vector<2x16xi1>, vector<2x16xf32>
    %c0_44 = arith.constant 0 : index
    %c0_45 = arith.constant 0 : index
    %58 = vector.load %arg16[%c0_44, %c0_45] : memref<2x16xf32, #tpu.memory_space<vmem>>, vector<2x16xf32>
    tpu.vector_store %arg16[%c0_44, %c0_45], %57 {strides = array<i32>} : memref<2x16xf32, #tpu.memory_space<vmem>>, vector<2x16xf32>,
    return
  }
  func.func @transform_0(%arg0: i32) -> (i32, i32) {
    %c0_i32 = arith.constant 0 : i32
    %c0_i32_0 = arith.constant 0 : i32
    return %arg0, %c0_i32 : i32, i32
  }
  func.func @transform_1(%arg0: i32) -> (i32, i32) {
    %c0_i32 = arith.constant 0 : i32
    %c0_i32_0 = arith.constant 0 : i32
    return %arg0, %c0_i32 : i32, i32
  }
  func.func @transform_2(%arg0: i32) -> (i32, i32) {
    %c0_i32 = arith.constant 0 : i32
    %c0_i32_0 = arith.constant 0 : i32
    return %arg0, %c0_i32 : i32, i32
  }
  func.func @transform_3(%arg0: i32) -> (i32, i32) {
    %c0_i32 = arith.constant 0 : i32
    %c0_i32_0 = arith.constant 0 : i32
    %c0_i32_1 = arith.constant 0 : i32
    return %c0_i32, %c0_i32_0 : i32, i32
  }
  func.func @transform_4(%arg0: i32) -> (i32, i32) {
    %c0_i32 = arith.constant 0 : i32
    %c0_i32_0 = arith.constant 0 : i32
    %c0_i32_1 = arith.constant 0 : i32
    return %c0_i32, %c0_i32_0 : i32, i32
  }
  func.func @transform_5(%arg0: i32) -> (i32, i32) {
    %c0_i32 = arith.constant 0 : i32
    %c0_i32_0 = arith.constant 0 : i32
    %c0_i32_1 = arith.constant 0 : i32
    return %c0_i32, %c0_i32_0 : i32, i32
  }
  func.func @transform_6(%arg0: i32) -> (i32, i32) {
    %c0_i32 = arith.constant 0 : i32
    %c0_i32_0 = arith.constant 0 : i32
    %c0_i32_1 = arith.constant 0 : i32
    return %c0_i32, %c0_i32_0 : i32, i32
  }
  func.func @transform_7(%arg0: i32) -> (i32, i32) {
    %c0_i32 = arith.constant 0 : i32
    %c0_i32_0 = arith.constant 0 : i32
    %c0_i32_1 = arith.constant 0 : i32
    return %c0_i32, %c0_i32_0 : i32, i32
  }
  func.func @transform_8(%arg0: i32) -> (i32, i32) {
    %c0_i32 = arith.constant 0 : i32
    %c0_i32_0 = arith.constant 0 : i32
    %c0_i32_1 = arith.constant 0 : i32
    return %c0_i32, %c0_i32_0 : i32, i32
  }
  func.func @transform_9(%arg0: i32) -> (i32, i32) {
    %c0_i32 = arith.constant 0 : i32
    %c0_i32_0 = arith.constant 0 : i32
    %c0_i32_1 = arith.constant 0 : i32
    return %c0_i32, %c0_i32_0 : i32, i32
  }
  func.func @transform_10(%arg0: i32) -> (i32, i32) {
    %c0_i32 = arith.constant 0 : i32
    %c0_i32_0 = arith.constant 0 : i32
    %c0_i32_1 = arith.constant 0 : i32
    return %c0_i32, %c0_i32_0 : i32, i32
  }
  func.func @transform_11(%arg0: i32) -> (i32, i32) {
    %c0_i32 = arith.constant 0 : i32
    %c0_i32_0 = arith.constant 0 : i32
    %c0_i32_1 = arith.constant 0 : i32
    return %c0_i32, %c0_i32_0 : i32, i32
  }
  func.func @transform_12(%arg0: i32) -> (i32, i32) {
    %c0_i32 = arith.constant 0 : i32
    %c0_i32_0 = arith.constant 0 : i32
    %c0_i32_1 = arith.constant 0 : i32
    return %c0_i32, %c0_i32_0 : i32, i32
  }
  func.func @transform_13(%arg0: i32) -> (i32, i32) {
    %c0_i32 = arith.constant 0 : i32
    %c0_i32_0 = arith.constant 0 : i32
    %c0_i32_1 = arith.constant 0 : i32
    return %c0_i32, %c0_i32_0 : i32, i32
  }
  func.func @transform_14(%arg0: i32) -> (i32, i32) {
    %c0_i32 = arith.constant 0 : i32
    %c0_i32_0 = arith.constant 0 : i32
    return %arg0, %c0_i32 : i32, i32
  }
  func.func @transform_15(%arg0: i32) -> (i32, i32) {
    %c0_i32 = arith.constant 0 : i32
    %c0_i32_0 = arith.constant 0 : i32
    return %arg0, %c0_i32 : i32, i32
  }
}

</mosaic_0001>

<llo_original>
// kernel: epic_projection.1
$region0: #{epic_projection.1}
  #allocation0 [shape = 'u32[]', space=smem, size = 0x4, offset = 0x4, fixed_abs, tag = 'smem constant byte address 0x4 - core index']
  #allocation1 [shape = 'u32[144,128]{1,0:T(1,128)}', space=vmem, size = 0x12000, scoped, tag = 'internal scratch']
  %s0 = inlined_call_operand.vmem [shape: f32[16,4], index: 0, kind: input, shape index: {}]
  %s1 = inlined_call_operand.vmem [shape: f32[2,8], index: 1, kind: input, shape index: {}]
  %s2 = inlined_call_operand.vmem [shape: f32[16,1], index: 2, kind: input, shape index: {}]
  %s3 = inlined_call_operand.vmem [shape: f32[2,16], index: 3, kind: input, shape index: {}]
  %s4 = inlined_call_operand.vmem [shape: f32[4,32], index: 4, kind: input, shape index: {}]
  %s5 = inlined_call_operand.vmem [shape: f32[1,32], index: 5, kind: input, shape index: {}]
  %s6 = inlined_call_operand.vmem [shape: f32[32,32], index: 6, kind: input, shape index: {}]
  %s7 = inlined_call_operand.vmem [shape: f32[32,32], index: 7, kind: input, shape index: {}]
  %s8 = inlined_call_operand.vmem [shape: f32[8,32], index: 8, kind: input, shape index: {}]
  %s9 = inlined_call_operand.vmem [shape: f32[1,32], index: 9, kind: input, shape index: {}]
  %s10 = inlined_call_operand.vmem [shape: f32[32,32], index: 10, kind: input, shape index: {}]
  %s11 = inlined_call_operand.vmem [shape: f32[1,32], index: 11, kind: input, shape index: {}]
  %s12 = inlined_call_operand.vmem [shape: f32[32,16], index: 12, kind: input, shape index: {}]
  %s13 = inlined_call_operand.vmem [shape: f32[1,16], index: 13, kind: input, shape index: {}]
  %s14 = inlined_call_operand.hbm [shape: f32[16,32], index: 14, kind: output, shape index: {0}]
  %s15 = inlined_call_operand.hbm [shape: f32[2,16], index: 15, kind: output, shape index: {1}]
  %16 = xla_tuple %s14, %s15
  %s17 = sld [smem:[#allocation0]]
  $region74: #{epic_projection.1} parent=0
    _
  %s19 = ssub.s32 1, %s17
  %s20 = scalar_select 0, %s19, %s17
  $region1: #{epic_projection.1} parent=0
    #allocation2 [shape = 'u8[8192]{0}', space=vmem, size = 0x2000, scoped, tag = 'output window, operand 0, single buffered']
    #allocation3 [shape = 's32[1]{0}', space=sflag, size = 0x4, scoped, tag = 'scoped memory for epic_projection.1']
    #allocation4 [shape = 'u8[1024]{0}', space=vmem, size = 0x400, scoped, tag = 'output window, operand 1, single buffered']
    #allocation5 [shape = 's32[1]{0}', space=sflag, size = 0x4, scoped, tag = 'scoped memory for epic_projection.1']
    %21 = vsyncpa [#allocation3], 0
    %22 = vsyncpa [#allocation5], 0
    // Predicated region
    $region2: #{epic_projection.1} parent=1 // pred_check
      _
    $region3: #{epic_projection.1} parent=1 // pred_check_branch
      %24 = sbr.rel (0) target = $region5
    $region4: #{epic_projection.1} parent=1 // pred_region
      _
    $region5: #{epic_projection.1} parent=1 // pred_fallthru
      _
    // Predicated region
    $region6: #{epic_projection.1} parent=1 // pred_check
      _
    $region7: #{epic_projection.1} parent=1 // pred_check_branch
      %26 = sbr.rel (0) target = $region9
    $region8: #{epic_projection.1} parent=1 // pred_region
      _
    $region9: #{epic_projection.1} parent=1 // pred_fallthru
      _
    // Predicated region
    $region10: #{epic_projection.1} parent=1 // pred_check
      _
    $region11: #{epic_projection.1} parent=1 // pred_check_branch
      %28 = sbr.rel (0) target = $region13
    $region12: #{epic_projection.1} parent=1 // pred_region
      _
    $region13: #{epic_projection.1} parent=1 // pred_fallthru
      _
    // Predicated region
    $region14: #{epic_projection.1} parent=1 // pred_check
      _
    $region15: #{epic_projection.1} parent=1 // pred_check_branch
      %30 = sbr.rel (0) target = $region17
    $region16: #{epic_projection.1} parent=1 // pred_region
      _
    $region17: #{epic_projection.1} parent=1 // pred_fallthru
      _
    // Predicated region
    $region18: #{epic_projection.1} parent=1 // pred_check
      _
    $region19: #{epic_projection.1} parent=1 // pred_check_branch
      %32 = sbr.rel (0) target = $region21
    $region20: #{epic_projection.1} parent=1 // pred_region
      _
    $region21: #{epic_projection.1} parent=1 // pred_fallthru
      _
    // Predicated region
    $region22: #{epic_projection.1} parent=1 // pred_check
      _
    $region23: #{epic_projection.1} parent=1 // pred_check_branch
      %34 = sbr.rel (0) target = $region25
    $region24: #{epic_projection.1} parent=1 // pred_region
      _
    $region25: #{epic_projection.1} parent=1 // pred_fallthru
      _
    // Predicated region
    $region26: #{epic_projection.1} parent=1 // pred_check
      _
    $region27: #{epic_projection.1} parent=1 // pred_check_branch
      %36 = sbr.rel (0) target = $region29
    $region28: #{epic_projection.1} parent=1 // pred_region
      _
    $region29: #{epic_projection.1} parent=1 // pred_fallthru
      _
    // Predicated region
    $region30: #{epic_projection.1} parent=1 // pred_check
      _
    $region31: #{epic_projection.1} parent=1 // pred_check_branch
      %38 = sbr.rel (0) target = $region33
    $region32: #{epic_projection.1} parent=1 // pred_region
      _
    $region33: #{epic_projection.1} parent=1 // pred_fallthru
      _
    // Predicated region
    $region34: #{epic_projection.1} parent=1 // pred_check
      _
    $region35: #{epic_projection.1} parent=1 // pred_check_branch
      %40 = sbr.rel (0) target = $region37
    $region36: #{epic_projection.1} parent=1 // pred_region
      _
    $region37: #{epic_projection.1} parent=1 // pred_fallthru
      _
    // Predicated region
    $region38: #{epic_projection.1} parent=1 // pred_check
      _
    $region39: #{epic_projection.1} parent=1 // pred_check_branch
      %42 = sbr.rel (0) target = $region41
    $region40: #{epic_projection.1} parent=1 // pred_region
      _
    $region41: #{epic_projection.1} parent=1 // pred_fallthru
      _
    // Predicated region
    $region42: #{epic_projection.1} parent=1 // pred_check
      _
    $region43: #{epic_projection.1} parent=1 // pred_check_branch
      %44 = sbr.rel (0) target = $region45
    $region44: #{epic_projection.1} parent=1 // pred_region
      _
    $region45: #{epic_projection.1} parent=1 // pred_fallthru
      _
    // Predicated region
    $region46: #{epic_projection.1} parent=1 // pred_check
      _
    $region47: #{epic_projection.1} parent=1 // pred_check_branch
      %46 = sbr.rel (0) target = $region49
    $region48: #{epic_projection.1} parent=1 // pred_region
      _
    $region49: #{epic_projection.1} parent=1 // pred_fallthru
      _
    // Predicated region
    $region50: #{epic_projection.1} parent=1 // pred_check
      _
    $region51: #{epic_projection.1} parent=1 // pred_check_branch
      %48 = sbr.rel (0) target = $region53
    $region52: #{epic_projection.1} parent=1 // pred_region
      _
    $region53: #{epic_projection.1} parent=1 // pred_fallthru
      _
    // Predicated region
    $region54: #{epic_projection.1} parent=1 // pred_check
      _
    $region55: #{epic_projection.1} parent=1 // pred_check_branch
      %50 = sbr.rel (0) target = $region57
    $region56: #{epic_projection.1} parent=1 // pred_region
      _
    $region57: #{epic_projection.1} parent=1 // pred_fallthru
      _
    %v51 = vld [vmem:[%s0] sm:$0xff]
    %v52 = vld [vmem:[%s0 + $0x8] sm:$0xff]
    %v53 = vld [vmem:[%s2] sm:$0xff]
    %v54 = vld [vmem:[%s2 + $0x8] sm:$0xff]
    %v55 = vld [vmem:[%s1] sm:$0x3]
    %v56 = vld [vmem:[%s3] sm:$0x3]
    %v57 = vld [vmem:[%s4] sm:$0xf]
    %v58 = vld [vmem:[%s5] sm:$0x1]
    %v60 = vlaneseq
    %v61 = vshrl.u32 %v60, 7
    %v62 = vsub.s32 0, %v61
    %v63 = vrot.slane %v58, %v62
    %vm65 = vcmask 31744
    %v67 = vsel %vm65, %v51, 0
    %v70 = vsel %vm65, %v52, 0
    %vm72 = vcmask 1043456
    %v74 = vsel %vm72, %v57, 0
    %76 = vmatprep.subr.mxu0 0.0
    %77 = vmatpush1.msra.mxu0 %v74
    %78 = vmatprep.subr.mxu0 0.0
    %79 = vmatpush1.msra.mxu0 0.0
    %80 = vmatprep.subr.mxu0 0.0
    %81 = vmatpush1.msra.mxu0 0.0
    %82 = vmatprep.subr.mxu0 0.0
    %83 = vmatpush1.msra.mxu0 0.0
    %84 = vmatprep.subr.mxu0 0.0
    %85 = vmatpush1.msra.mxu0 0.0
    %86 = vmatprep.subr.mxu0 0.0
    %87 = vmatpush1.msra.mxu0 0.0
    %88 = vmatprep.subr.mxu0 0.0
    %89 = vmatpush1.msra.mxu0 0.0
    %90 = vmatprep.subr.mxu0 0.0
    %91 = vmatpush1.msra.mxu0 0.0
    %92 = vmatprep.subr.mxu0 0.0
    %93 = vmatpush1.msra.mxu0 0.0
    %94 = vmatprep.subr.mxu0 0.0
    %95 = vmatpush1.msra.mxu0 0.0
    %96 = vmatprep.subr.mxu0 0.0
    %97 = vmatpush1.msra.mxu0 0.0
    %98 = vmatprep.subr.mxu0 0.0
    %99 = vmatpush1.msra.mxu0 0.0
    %100 = vmatprep.subr.mxu0 0.0
    %101 = vmatpush1.msra.mxu0 0.0
    %102 = vmatprep.subr.mxu0 0.0
    %103 = vmatpush1.msra.mxu0 0.0
    %104 = vmatprep.subr.mxu0 0.0
    %105 = vmatpush1.msra.mxu0 0.0
    %106 = vmatprep.subr.mxu0 0.0
    %107 = vmatpush1.msra.mxu0 0.0
    %108 = vmatprep.subr.mxu0 0.0
    %109 = vmatpush1.msra.mxu0 0.0
    %110 = vmatprep.subr.mxu0 0.0
    %111 = vmatpush1.msra.mxu0 0.0
    %112 = vmatprep.subr.mxu0 0.0
    %113 = vmatpush1.msra.mxu0 0.0
    %114 = vmatprep.subr.mxu0 0.0
    %115 = vmatpush1.msra.mxu0 0.0
    %116 = vmatprep.subr.mxu0 0.0
    %117 = vmatpush1.msra.mxu0 0.0
    %118 = vmatprep.subr.mxu0 0.0
    %119 = vmatpush1.msra.mxu0 0.0
    %120 = vmatprep.subr.mxu0 0.0
    %121 = vmatpush1.msra.mxu0 0.0
    %122 = vmatprep.subr.mxu0 0.0
    %123 = vmatpush1.msra.mxu0 0.0
    %124 = vmatprep.subr.mxu0 0.0
    %125 = vmatpush1.msra.mxu0 0.0
    %126 = vmatprep.subr.mxu0 0.0
    %127 = vmatpush1.msra.mxu0 0.0
    %128 = vmatprep.subr.mxu0 0.0
    %129 = vmatpush1.msra.mxu0 0.0
    %130 = vmatprep.subr.mxu0 0.0
    %131 = vmatpush1.msra.mxu0 0.0
    %132 = vmatprep.subr.mxu0 0.0
    %133 = vmatpush1.msra.mxu0 0.0
    %134 = vmatprep.subr.mxu0 0.0
    %135 = vmatpush1.msra.mxu0 0.0
    %136 = vmatprep.subr.mxu0 0.0
    %137 = vmatpush1.msra.mxu0 0.0
    %138 = vmatprep.subr.mxu0 0.0
    %139 = vmatpush1.msra.mxu0 0.0
    %140 = vmatprep.mubr.f32.mxu0 0.0
    %141 = vmatmul.mubr.f32.gmra.mrb[0].mxu0 %v67
    %v142 = vpop.f32.mrb[0].mxu0
    %v143 = vadd.f32 %v63, %v142
    %v144 = vpop.f32.mrb[0].mxu0
    %145 = vmatprep.mubr.f32.mxu0 0.0
    %146 = vmatmul.mubr.f32.gmra.mrb[0].mxu0 %v70
    %v147 = vpop.f32.mrb[0].mxu0
    %v148 = vadd.f32 %v63, %v147
    %v149 = vpop.f32.mrb[0].mxu0
    %150 = vdwg.mxu0
    %vm151 = vcmp.ge.f32.partialorder %v143, 0.0
    %vm152 = vcmp.ge.f32.partialorder %v148, 0.0
    %v153 = vmul.f32 %v143, 0.01
    %v154 = vmul.f32 %v148, 0.01
    %v155 = vsel %vm151, %v143, %v153
    %v156 = vsel %vm152, %v148, %v154
    %158 = vset.pattern.permute.xlu0 0
    %159 = vperm.xlu0 %158, %v53
    %v160 = vpop.permute.xlu0 %159
    %163 = vset.pattern.permute.xlu0 0
    %164 = vperm.xlu0 %163, %v54
    %v165 = vpop.permute.xlu0 %164
    %v167 = vmul.f32 %v155, %v160
    %v168 = vmul.f32 %v156, %v165
    %vm169 = vcmask 261120
    %170 = vst.msk [vmem:[#allocation2] sm:$0xff] %vm169, %v167
    %171 = vst.msk [vmem:[#allocation2 + $0x8] sm:$0xff] %vm169, %v168
    %vm172 = vcmask 130048
    %v174 = vsel %vm172, %v56, 0
    %176 = vmatprep.subr.mxu0 0.0
    %177 = vmatpush1.msra.mxu0 %v167
    %178 = vmatprep.subr.mxu0 0.0
    %179 = vmatpush1.msra.mxu0 %v168
    %180 = vmatprep.subr.mxu0 0.0
    %181 = vmatpush1.msra.mxu0 0.0
    %182 = vmatprep.subr.mxu0 0.0
    %183 = vmatpush1.msra.mxu0 0.0
    %184 = vmatprep.subr.mxu0 0.0
    %185 = vmatpush1.msra.mxu0 0.0
    %186 = vmatprep.subr.mxu0 0.0
    %187 = vmatpush1.msra.mxu0 0.0
    %188 = vmatprep.subr.mxu0 0.0
    %189 = vmatpush1.msra.mxu0 0.0
    %190 = vmatprep.subr.mxu0 0.0
    %191 = vmatpush1.msra.mxu0 0.0
    %192 = vmatprep.subr.mxu0 0.0
    %193 = vmatpush1.msra.mxu0 0.0
    %194 = vmatprep.subr.mxu0 0.0
    %195 = vmatpush1.msra.mxu0 0.0
    %196 = vmatprep.subr.mxu0 0.0
    %197 = vmatpush1.msra.mxu0 0.0
    %198 = vmatprep.subr.mxu0 0.0
    %199 = vmatpush1.msra.mxu0 0.0
    %200 = vmatprep.subr.mxu0 0.0
    %201 = vmatpush1.msra.mxu0 0.0
    %202 = vmatprep.subr.mxu0 0.0
    %203 = vmatpush1.msra.mxu0 0.0
    %204 = vmatprep.subr.mxu0 0.0
    %205 = vmatpush1.msra.mxu0 0.0
    %206 = vmatprep.subr.mxu0 0.0
    %207 = vmatpush1.msra.mxu0 0.0
    %208 = vmatprep.subr.mxu0 0.0
    %209 = vmatpush1.msra.mxu0 0.0
    %210 = vmatprep.subr.mxu0 0.0
    %211 = vmatpush1.msra.mxu0 0.0
    %212 = vmatprep.subr.mxu0 0.0
    %213 = vmatpush1.msra.mxu0 0.0
    %214 = vmatprep.subr.mxu0 0.0
    %215 = vmatpush1.msra.mxu0 0.0
    %216 = vmatprep.subr.mxu0 0.0
    %217 = vmatpush1.msra.mxu0 0.0
    %218 = vmatprep.subr.mxu0 0.0
    %219 = vmatpush1.msra.mxu0 0.0
    %220 = vmatprep.subr.mxu0 0.0
    %221 = vmatpush1.msra.mxu0 0.0
    %222 = vmatprep.subr.mxu0 0.0
    %223 = vmatpush1.msra.mxu0 0.0
    %224 = vmatprep.subr.mxu0 0.0
    %225 = vmatpush1.msra.mxu0 0.0
    %226 = vmatprep.subr.mxu0 0.0
    %227 = vmatpush1.msra.mxu0 0.0
    %228 = vmatprep.subr.mxu0 0.0
    %229 = vmatpush1.msra.mxu0 0.0
    %230 = vmatprep.subr.mxu0 0.0
    %231 = vmatpush1.msra.mxu0 0.0
    %232 = vmatprep.subr.mxu0 0.0
    %233 = vmatpush1.msra.mxu0 0.0
    %234 = vmatprep.subr.mxu0 0.0
    %235 = vmatpush1.msra.mxu0 0.0
    %236 = vmatprep.subr.mxu0 0.0
    %237 = vmatpush1.msra.mxu0 0.0
    %238 = vmatprep.subr.mxu0 0.0
    %239 = vmatpush1.msra.mxu0 0.0
    %240 = vmatprep.mubr.f32.mxu0 0.0
    %241 = vmatmul.mubr.f32.gmra.mrb[0].mxu0 %v174
    %v242 = vpop.f32.mrb[0].mxu0
    %v243 = vadd.f32 0.0, %v242
    %v244 = vpop.f32.mrb[0].mxu0
    %245 = vdwg.mxu0
    %246 = vmatprep.subr.mxu0 0.0
    %247 = vmatpush1.msra.mxu0 %v53
    %248 = vmatprep.subr.mxu0 0.0
    %249 = vmatpush1.msra.mxu0 %v54
    %250 = vmatprep.subr.mxu0 0.0
    %251 = vmatpush1.msra.mxu0 0.0
    %252 = vmatprep.subr.mxu0 0.0
    %253 = vmatpush1.msra.mxu0 0.0
    %254 = vmatprep.subr.mxu0 0.0
    %255 = vmatpush1.msra.mxu0 0.0
    %256 = vmatprep.subr.mxu0 0.0
    %257 = vmatpush1.msra.mxu0 0.0
    %258 = vmatprep.subr.mxu0 0.0
    %259 = vmatpush1.msra.mxu0 0.0
    %260 = vmatprep.subr.mxu0 0.0
    %261 = vmatpush1.msra.mxu0 0.0
    %262 = vmatprep.subr.mxu0 0.0
    %263 = vmatpush1.msra.mxu0 0.0
    %264 = vmatprep.subr.mxu0 0.0
    %265 = vmatpush1.msra.mxu0 0.0
    %266 = vmatprep.subr.mxu0 0.0
    %267 = vmatpush1.msra.mxu0 0.0
    %268 = vmatprep.subr.mxu0 0.0
    %269 = vmatpush1.msra.mxu0 0.0
    %270 = vmatprep.subr.mxu0 0.0
    %271 = vmatpush1.msra.mxu0 0.0
    %272 = vmatprep.subr.mxu0 0.0
    %273 = vmatpush1.msra.mxu0 0.0
    %274 = vmatprep.subr.mxu0 0.0
    %275 = vmatpush1.msra.mxu0 0.0
    %276 = vmatprep.subr.mxu0 0.0
    %277 = vmatpush1.msra.mxu0 0.0
    %278 = vmatprep.subr.mxu0 0.0
    %279 = vmatpush1.msra.mxu0 0.0
    %280 = vmatprep.subr.mxu0 0.0
    %281 = vmatpush1.msra.mxu0 0.0
    %282 = vmatprep.subr.mxu0 0.0
    %283 = vmatpush1.msra.mxu0 0.0
    %284 = vmatprep.subr.mxu0 0.0
    %285 = vmatpush1.msra.mxu0 0.0
    %286 = vmatprep.subr.mxu0 0.0
    %287 = vmatpush1.msra.mxu0 0.0
    %288 = vmatprep.subr.mxu0 0.0
    %289 = vmatpush1.msra.mxu0 0.0
    %290 = vmatprep.subr.mxu0 0.0
    %291 = vmatpush1.msra.mxu0 0.0
    %292 = vmatprep.subr.mxu0 0.0
    %293 = vmatpush1.msra.mxu0 0.0
    %294 = vmatprep.subr.mxu0 0.0
    %295 = vmatpush1.msra.mxu0 0.0
    %296 = vmatprep.subr.mxu0 0.0
    %297 = vmatpush1.msra.mxu0 0.0
    %298 = vmatprep.subr.mxu0 0.0
    %299 = vmatpush1.msra.mxu0 0.0
    %300 = vmatprep.subr.mxu0 0.0
    %301 = vmatpush1.msra.mxu0 0.0
    %302 = vmatprep.subr.mxu0 0.0
    %303 = vmatpush1.msra.mxu0 0.0
    %304 = vmatprep.subr.mxu0 0.0
    %305 = vmatpush1.msra.mxu0 0.0
    %306 = vmatprep.subr.mxu0 0.0
    %307 = vmatpush1.msra.mxu0 0.0
    %308 = vmatprep.subr.mxu0 0.0
    %309 = vmatpush1.msra.mxu0 0.0
    %310 = vmatprep.mubr.f32.mxu0 0.0
    %311 = vmatmul.mubr.f32.gmra.mrb[0].mxu0 %v174
    %v312 = vpop.f32.mrb[0].mxu0
    %v313 = vadd.f32 0.0, %v312
    %v314 = vpop.f32.mrb[0].mxu0
    %315 = vdwg.mxu0
    %v316 = vrcp.pop %v313
    %v317 = vld [vmem:[%s6] sm:$0xff]
    %v318 = vld [vmem:[%s6 + $0x8] sm:$0xff]
    %v319 = vld [vmem:[%s6 + $0x10] sm:$0xff]
    %v320 = vld [vmem:[%s6 + $0x18] sm:$0xff]
    %v322 = vsel %vm169, %v243, 0
    %324 = vmatprep.subr.mxu0 0.0
    %325 = vmatpush1.msra.mxu0 %v317
    %326 = vmatprep.subr.mxu0 0.0
    %327 = vmatpush1.msra.mxu0 %v318
    %328 = vmatprep.subr.mxu0 0.0
    %329 = vmatpush1.msra.mxu0 %v319
    %330 = vmatprep.subr.mxu0 0.0
    %331 = vmatpush1.msra.mxu0 %v320
    %332 = vmatprep.subr.mxu0 0.0
    %333 = vmatpush1.msra.mxu0 0.0
    %334 = vmatprep.subr.mxu0 0.0
    %335 = vmatpush1.msra.mxu0 0.0
    %336 = vmatprep.subr.mxu0 0.0
    %337 = vmatpush1.msra.mxu0 0.0
    %338 = vmatprep.subr.mxu0 0.0
    %339 = vmatpush1.msra.mxu0 0.0
    %340 = vmatprep.subr.mxu0 0.0
    %341 = vmatpush1.msra.mxu0 0.0
    %342 = vmatprep.subr.mxu0 0.0
    %343 = vmatpush1.msra.mxu0 0.0
    %344 = vmatprep.subr.mxu0 0.0
    %345 = vmatpush1.msra.mxu0 0.0
    %346 = vmatprep.subr.mxu0 0.0
    %347 = vmatpush1.msra.mxu0 0.0
    %348 = vmatprep.subr.mxu0 0.0
    %349 = vmatpush1.msra.mxu0 0.0
    %350 = vmatprep.subr.mxu0 0.0
    %351 = vmatpush1.msra.mxu0 0.0
    %352 = vmatprep.subr.mxu0 0.0
    %353 = vmatpush1.msra.mxu0 0.0
    %354 = vmatprep.subr.mxu0 0.0
    %355 = vmatpush1.msra.mxu0 0.0
    %356 = vmatprep.subr.mxu0 0.0
    %357 = vmatpush1.msra.mxu0 0.0
    %358 = vmatprep.subr.mxu0 0.0
    %359 = vmatpush1.msra.mxu0 0.0
    %360 = vmatprep.subr.mxu0 0.0
    %361 = vmatpush1.msra.mxu0 0.0
    %362 = vmatprep.subr.mxu0 0.0
    %363 = vmatpush1.msra.mxu0 0.0
    %364 = vmatprep.subr.mxu0 0.0
    %365 = vmatpush1.msra.mxu0 0.0
    %366 = vmatprep.subr.mxu0 0.0
    %367 = vmatpush1.msra.mxu0 0.0
    %368 = vmatprep.subr.mxu0 0.0
    %369 = vmatpush1.msra.mxu0 0.0
    %370 = vmatprep.subr.mxu0 0.0
    %371 = vmatpush1.msra.mxu0 0.0
    %372 = vmatprep.subr.mxu0 0.0
    %373 = vmatpush1.msra.mxu0 0.0
    %374 = vmatprep.subr.mxu0 0.0
    %375 = vmatpush1.msra.mxu0 0.0
    %376 = vmatprep.subr.mxu0 0.0
    %377 = vmatpush1.msra.mxu0 0.0
    %378 = vmatprep.subr.mxu0 0.0
    %379 = vmatpush1.msra.mxu0 0.0
    %380 = vmatprep.subr.mxu0 0.0
    %381 = vmatpush1.msra.mxu0 0.0
    %382 = vmatprep.subr.mxu0 0.0
    %383 = vmatpush1.msra.mxu0 0.0
    %384 = vmatprep.subr.mxu0 0.0
    %385 = vmatpush1.msra.mxu0 0.0
    %386 = vmatprep.subr.mxu0 0.0
    %387 = vmatpush1.msra.mxu0 0.0
    %388 = vmatprep.mubr.f32.mxu0 0.0
    %389 = vmatmul.mubr.f32.gmra.mrb[0].mxu0 %v322
    %v390 = vpop.f32.mrb[0].mxu0
    %v391 = vadd.f32 0.0, %v390
    %v392 = vpop.f32.mrb[0].mxu0
    %393 = vdwg.mxu0
    %395 = vset.pattern.permute.xlu0 0
    %396 = vperm.xlu0 %395, %v316
    %v397 = vpop.permute.xlu0 %396
    %v399 = vmul.f32 %v391, %v397
    %v400 = vld [vmem:[%s7] sm:$0xff]
    %v401 = vld [vmem:[%s7 + $0x8] sm:$0xff]
    %v402 = vld [vmem:[%s7 + $0x10] sm:$0xff]
    %v403 = vld [vmem:[%s7 + $0x18] sm:$0xff]
    %404 = vmatprep.subr.mxu0 0.0
    %405 = vmatpush1.msra.mxu0 %v400
    %406 = vmatprep.subr.mxu0 0.0
    %407 = vmatpush1.msra.mxu0 %v401
    %408 = vmatprep.subr.mxu0 0.0
    %409 = vmatpush1.msra.mxu0 %v402
    %410 = vmatprep.subr.mxu0 0.0
    %411 = vmatpush1.msra.mxu0 %v403
    %412 = vmatprep.subr.mxu0 0.0
    %413 = vmatpush1.msra.mxu0 0.0
    %414 = vmatprep.subr.mxu0 0.0
    %415 = vmatpush1.msra.mxu0 0.0
    %416 = vmatprep.subr.mxu0 0.0
    %417 = vmatpush1.msra.mxu0 0.0
    %418 = vmatprep.subr.mxu0 0.0
    %419 = vmatpush1.msra.mxu0 0.0
    %420 = vmatprep.subr.mxu0 0.0
    %421 = vmatpush1.msra.mxu0 0.0
    %422 = vmatprep.subr.mxu0 0.0
    %423 = vmatpush1.msra.mxu0 0.0
    %424 = vmatprep.subr.mxu0 0.0
    %425 = vmatpush1.msra.mxu0 0.0
    %426 = vmatprep.subr.mxu0 0.0
    %427 = vmatpush1.msra.mxu0 0.0
    %428 = vmatprep.subr.mxu0 0.0
    %429 = vmatpush1.msra.mxu0 0.0
    %430 = vmatprep.subr.mxu0 0.0
    %431 = vmatpush1.msra.mxu0 0.0
    %432 = vmatprep.subr.mxu0 0.0
    %433 = vmatpush1.msra.mxu0 0.0
    %434 = vmatprep.subr.mxu0 0.0
    %435 = vmatpush1.msra.mxu0 0.0
    %436 = vmatprep.subr.mxu0 0.0
    %437 = vmatpush1.msra.mxu0 0.0
    %438 = vmatprep.subr.mxu0 0.0
    %439 = vmatpush1.msra.mxu0 0.0
    %440 = vmatprep.subr.mxu0 0.0
    %441 = vmatpush1.msra.mxu0 0.0
    %442 = vmatprep.subr.mxu0 0.0
    %443 = vmatpush1.msra.mxu0 0.0
    %444 = vmatprep.subr.mxu0 0.0
    %445 = vmatpush1.msra.mxu0 0.0
    %446 = vmatprep.subr.mxu0 0.0
    %447 = vmatpush1.msra.mxu0 0.0
    %448 = vmatprep.subr.mxu0 0.0
    %449 = vmatpush1.msra.mxu0 0.0
    %450 = vmatprep.subr.mxu0 0.0
    %451 = vmatpush1.msra.mxu0 0.0
    %452 = vmatprep.subr.mxu0 0.0
    %453 = vmatpush1.msra.mxu0 0.0
    %454 = vmatprep.subr.mxu0 0.0
    %455 = vmatpush1.msra.mxu0 0.0
    %456 = vmatprep.subr.mxu0 0.0
    %457 = vmatpush1.msra.mxu0 0.0
    %458 = vmatprep.subr.mxu0 0.0
    %459 = vmatpush1.msra.mxu0 0.0
    %460 = vmatprep.subr.mxu0 0.0
    %461 = vmatpush1.msra.mxu0 0.0
    %462 = vmatprep.subr.mxu0 0.0
    %463 = vmatpush1.msra.mxu0 0.0
    %464 = vmatprep.subr.mxu0 0.0
    %465 = vmatpush1.msra.mxu0 0.0
    %466 = vmatprep.subr.mxu0 0.0
    %467 = vmatpush1.msra.mxu0 0.0
    %468 = vmatprep.mubr.f32.mxu0 0.0
    %469 = vmatmul.mubr.f32.gmra.mrb[0].mxu0 %v322
    %v470 = vpop.f32.mrb[0].mxu0
    %v471 = vadd.f32 0.0, %v470
    %v472 = vpop.f32.mrb[0].mxu0
    %473 = vdwg.mxu0
    %v474 = vadd.f32 %v399, %v471
    %v475 = vld [vmem:[%s8] sm:$0xff]
    %vm476 = vcmask 64512
    %v478 = vsel %vm476, %v55, 0
    %480 = vmatprep.subr.mxu0 0.0
    %481 = vmatpush1.msra.mxu0 %v475
    %482 = vmatprep.subr.mxu0 0.0
    %483 = vmatpush1.msra.mxu0 0.0
    %484 = vmatprep.subr.mxu0 0.0
    %485 = vmatpush1.msra.mxu0 0.0
    %486 = vmatprep.subr.mxu0 0.0
    %487 = vmatpush1.msra.mxu0 0.0
    %488 = vmatprep.subr.mxu0 0.0
    %489 = vmatpush1.msra.mxu0 0.0
    %490 = vmatprep.subr.mxu0 0.0
    %491 = vmatpush1.msra.mxu0 0.0
    %492 = vmatprep.subr.mxu0 0.0
    %493 = vmatpush1.msra.mxu0 0.0
    %494 = vmatprep.subr.mxu0 0.0
    %495 = vmatpush1.msra.mxu0 0.0
    %496 = vmatprep.subr.mxu0 0.0
    %497 = vmatpush1.msra.mxu0 0.0
    %498 = vmatprep.subr.mxu0 0.0
    %499 = vmatpush1.msra.mxu0 0.0
    %500 = vmatprep.subr.mxu0 0.0
    %501 = vmatpush1.msra.mxu0 0.0
    %502 = vmatprep.subr.mxu0 0.0
    %503 = vmatpush1.msra.mxu0 0.0
    %504 = vmatprep.subr.mxu0 0.0
    %505 = vmatpush1.msra.mxu0 0.0
    %506 = vmatprep.subr.mxu0 0.0
    %507 = vmatpush1.msra.mxu0 0.0
    %508 = vmatprep.subr.mxu0 0.0
    %509 = vmatpush1.msra.mxu0 0.0
    %510 = vmatprep.subr.mxu0 0.0
    %511 = vmatpush1.msra.mxu0 0.0
    %512 = vmatprep.subr.mxu0 0.0
    %513 = vmatpush1.msra.mxu0 0.0
    %514 = vmatprep.subr.mxu0 0.0
    %515 = vmatpush1.msra.mxu0 0.0
    %516 = vmatprep.subr.mxu0 0.0
    %517 = vmatpush1.msra.mxu0 0.0
    %518 = vmatprep.subr.mxu0 0.0
    %519 = vmatpush1.msra.mxu0 0.0
    %520 = vmatprep.subr.mxu0 0.0
    %521 = vmatpush1.msra.mxu0 0.0
    %522 = vmatprep.subr.mxu0 0.0
    %523 = vmatpush1.msra.mxu0 0.0
    %524 = vmatprep.subr.mxu0 0.0
    %525 = vmatpush1.msra.mxu0 0.0
    %526 = vmatprep.subr.mxu0 0.0
    %527 = vmatpush1.msra.mxu0 0.0
    %528 = vmatprep.subr.mxu0 0.0
    %529 = vmatpush1.msra.mxu0 0.0
    %530 = vmatprep.subr.mxu0 0.0
    %531 = vmatpush1.msra.mxu0 0.0
    %532 = vmatprep.subr.mxu0 0.0
    %533 = vmatpush1.msra.mxu0 0.0
    %534 = vmatprep.subr.mxu0 0.0
    %535 = vmatpush1.msra.mxu0 0.0
    %536 = vmatprep.subr.mxu0 0.0
    %537 = vmatpush1.msra.mxu0 0.0
    %538 = vmatprep.subr.mxu0 0.0
    %539 = vmatpush1.msra.mxu0 0.0
    %540 = vmatprep.subr.mxu0 0.0
    %541 = vmatpush1.msra.mxu0 0.0
    %542 = vmatprep.subr.mxu0 0.0
    %543 = vmatpush1.msra.mxu0 0.0
    %544 = vmatprep.mubr.f32.mxu0 0.0
    %545 = vmatmul.mubr.f32.gmra.mrb[0].mxu0 %v478
    %v546 = vpop.f32.mrb[0].mxu0
    %v547 = vadd.f32 0.0, %v546
    %v548 = vpop.f32.mrb[0].mxu0
    %549 = vdwg.mxu0
    %v550 = vadd.f32 %v474, %v547
    %v551 = vld [vmem:[%s9] sm:$0x1]
    %v553 = vlaneseq
    %v554 = vshrl.u32 %v553, 7
    %v555 = vsub.s32 0, %v554
    %v556 = vrot.slane %v551, %v555
    %v558 = vadd.f32 %v550, %v556
    %vm559 = vcmp.ge.f32.partialorder %v558, 0.0
    %v560 = vmul.f32 %v558, 0.01
    %v561 = vsel %vm559, %v558, %v560
    %v562 = vld [vmem:[%s10] sm:$0xff]
    %v563 = vld [vmem:[%s10 + $0x8] sm:$0xff]
    %v564 = vld [vmem:[%s10 + $0x10] sm:$0xff]
    %v565 = vld [vmem:[%s10 + $0x18] sm:$0xff]
    %v566 = vld [vmem:[%s11] sm:$0x1]
    %v568 = vlaneseq
    %v569 = vshrl.u32 %v568, 7
    %v570 = vsub.s32 0, %v569
    %v571 = vrot.slane %v566, %v570
    %v574 = vsel %vm169, %v561, 0
    %576 = vmatprep.subr.mxu0 0.0
    %577 = vmatpush1.msra.mxu0 %v562
    %578 = vmatprep.subr.mxu0 0.0
    %579 = vmatpush1.msra.mxu0 %v563
    %580 = vmatprep.subr.mxu0 0.0
    %581 = vmatpush1.msra.mxu0 %v564
    %582 = vmatprep.subr.mxu0 0.0
    %583 = vmatpush1.msra.mxu0 %v565
    %584 = vmatprep.subr.mxu0 0.0
    %585 = vmatpush1.msra.mxu0 0.0
    %586 = vmatprep.subr.mxu0 0.0
    %587 = vmatpush1.msra.mxu0 0.0
    %588 = vmatprep.subr.mxu0 0.0
    %589 = vmatpush1.msra.mxu0 0.0
    %590 = vmatprep.subr.mxu0 0.0
    %591 = vmatpush1.msra.mxu0 0.0
    %592 = vmatprep.subr.mxu0 0.0
    %593 = vmatpush1.msra.mxu0 0.0
    %594 = vmatprep.subr.mxu0 0.0
    %595 = vmatpush1.msra.mxu0 0.0
    %596 = vmatprep.subr.mxu0 0.0
    %597 = vmatpush1.msra.mxu0 0.0
    %598 = vmatprep.subr.mxu0 0.0
    %599 = vmatpush1.msra.mxu0 0.0
    %600 = vmatprep.subr.mxu0 0.0
    %601 = vmatpush1.msra.mxu0 0.0
    %602 = vmatprep.subr.mxu0 0.0
    %603 = vmatpush1.msra.mxu0 0.0
    %604 = vmatprep.subr.mxu0 0.0
    %605 = vmatpush1.msra.mxu0 0.0
    %606 = vmatprep.subr.mxu0 0.0
    %607 = vmatpush1.msra.mxu0 0.0
    %608 = vmatprep.subr.mxu0 0.0
    %609 = vmatpush1.msra.mxu0 0.0
    %610 = vmatprep.subr.mxu0 0.0
    %611 = vmatpush1.msra.mxu0 0.0
    %612 = vmatprep.subr.mxu0 0.0
    %613 = vmatpush1.msra.mxu0 0.0
    %614 = vmatprep.subr.mxu0 0.0
    %615 = vmatpush1.msra.mxu0 0.0
    %616 = vmatprep.subr.mxu0 0.0
    %617 = vmatpush1.msra.mxu0 0.0
    %618 = vmatprep.subr.mxu0 0.0
    %619 = vmatpush1.msra.mxu0 0.0
    %620 = vmatprep.subr.mxu0 0.0
    %621 = vmatpush1.msra.mxu0 0.0
    %622 = vmatprep.subr.mxu0 0.0
    %623 = vmatpush1.msra.mxu0 0.0
    %624 = vmatprep.subr.mxu0 0.0
    %625 = vmatpush1.msra.mxu0 0.0
    %626 = vmatprep.subr.mxu0 0.0
    %627 = vmatpush1.msra.mxu0 0.0
    %628 = vmatprep.subr.mxu0 0.0
    %629 = vmatpush1.msra.mxu0 0.0
    %630 = vmatprep.subr.mxu0 0.0
    %631 = vmatpush1.msra.mxu0 0.0
    %632 = vmatprep.subr.mxu0 0.0
    %633 = vmatpush1.msra.mxu0 0.0
    %634 = vmatprep.subr.mxu0 0.0
    %635 = vmatpush1.msra.mxu0 0.0
    %636 = vmatprep.subr.mxu0 0.0
    %637 = vmatpush1.msra.mxu0 0.0
    %638 = vmatprep.subr.mxu0 0.0
    %639 = vmatpush1.msra.mxu0 0.0
    %640 = vmatprep.mubr.f32.mxu0 0.0
    %641 = vmatmul.mubr.f32.gmra.mrb[0].mxu0 %v574
    %v642 = vpop.f32.mrb[0].mxu0
    %v643 = vadd.f32 %v571, %v642
    %v644 = vpop.f32.mrb[0].mxu0
    %645 = vdwg.mxu0
    %vm646 = vcmp.ge.f32.partialorder %v643, 0.0
    %v647 = vmul.f32 %v643, 0.01
    %v648 = vsel %vm646, %v643, %v647
    %v649 = vld [vmem:[%s12] sm:$0xff]
    %v650 = vld [vmem:[%s12 + $0x8] sm:$0xff]
    %v651 = vld [vmem:[%s12 + $0x10] sm:$0xff]
    %v652 = vld [vmem:[%s12 + $0x18] sm:$0xff]
    %v653 = vld [vmem:[%s13] sm:$0x1]
    %v655 = vlaneseq
    %v656 = vshrl.u32 %v655, 7
    %v657 = vsub.s32 0, %v656
    %v658 = vrot.slane %v653, %v657
    %v661 = vsel %vm169, %v648, 0
    %663 = vmatprep.subr.mxu0 0.0
    %664 = vmatpush1.msra.mxu0 %v649
    %665 = vmatprep.subr.mxu0 0.0
    %666 = vmatpush1.msra.mxu0 %v650
    %667 = vmatprep.subr.mxu0 0.0
    %668 = vmatpush1.msra.mxu0 %v651
    %669 = vmatprep.subr.mxu0 0.0
    %670 = vmatpush1.msra.mxu0 %v652
    %671 = vmatprep.subr.mxu0 0.0
    %672 = vmatpush1.msra.mxu0 0.0
    %673 = vmatprep.subr.mxu0 0.0
    %674 = vmatpush1.msra.mxu0 0.0
    %675 = vmatprep.subr.mxu0 0.0
    %676 = vmatpush1.msra.mxu0 0.0
    %677 = vmatprep.subr.mxu0 0.0
    %678 = vmatpush1.msra.mxu0 0.0
    %679 = vmatprep.subr.mxu0 0.0
    %680 = vmatpush1.msra.mxu0 0.0
    %681 = vmatprep.subr.mxu0 0.0
    %682 = vmatpush1.msra.mxu0 0.0
    %683 = vmatprep.subr.mxu0 0.0
    %684 = vmatpush1.msra.mxu0 0.0
    %685 = vmatprep.subr.mxu0 0.0
    %686 = vmatpush1.msra.mxu0 0.0
    %687 = vmatprep.subr.mxu0 0.0
    %688 = vmatpush1.msra.mxu0 0.0
    %689 = vmatprep.subr.mxu0 0.0
    %690 = vmatpush1.msra.mxu0 0.0
    %691 = vmatprep.subr.mxu0 0.0
    %692 = vmatpush1.msra.mxu0 0.0
    %693 = vmatprep.subr.mxu0 0.0
    %694 = vmatpush1.msra.mxu0 0.0
    %695 = vmatprep.subr.mxu0 0.0
    %696 = vmatpush1.msra.mxu0 0.0
    %697 = vmatprep.subr.mxu0 0.0
    %698 = vmatpush1.msra.mxu0 0.0
    %699 = vmatprep.subr.mxu0 0.0
    %700 = vmatpush1.msra.mxu0 0.0
    %701 = vmatprep.subr.mxu0 0.0
    %702 = vmatpush1.msra.mxu0 0.0
    %703 = vmatprep.subr.mxu0 0.0
    %704 = vmatpush1.msra.mxu0 0.0
    %705 = vmatprep.subr.mxu0 0.0
    %706 = vmatpush1.msra.mxu0 0.0
    %707 = vmatprep.subr.mxu0 0.0
    %708 = vmatpush1.msra.mxu0 0.0
    %709 = vmatprep.subr.mxu0 0.0
    %710 = vmatpush1.msra.mxu0 0.0
    %711 = vmatprep.subr.mxu0 0.0
    %712 = vmatpush1.msra.mxu0 0.0
    %713 = vmatprep.subr.mxu0 0.0
    %714 = vmatpush1.msra.mxu0 0.0
    %715 = vmatprep.subr.mxu0 0.0
    %716 = vmatpush1.msra.mxu0 0.0
    %717 = vmatprep.subr.mxu0 0.0
    %718 = vmatpush1.msra.mxu0 0.0
    %719 = vmatprep.subr.mxu0 0.0
    %720 = vmatpush1.msra.mxu0 0.0
    %721 = vmatprep.subr.mxu0 0.0
    %722 = vmatpush1.msra.mxu0 0.0
    %723 = vmatprep.subr.mxu0 0.0
    %724 = vmatpush1.msra.mxu0 0.0
    %725 = vmatprep.subr.mxu0 0.0
    %726 = vmatpush1.msra.mxu0 0.0
    %727 = vmatprep.mubr.f32.mxu0 0.0
    %728 = vmatmul.mubr.f32.gmra.mrb[0].mxu0 %v661
    %v729 = vpop.f32.mrb[0].mxu0
    %v730 = vadd.f32 %v658, %v729
    %v731 = vpop.f32.mrb[0].mxu0
    %732 = vdwg.mxu0
    %vm733 = vcmp.ge.f32.partialorder %v730, 0.0
    %v734 = vmul.f32 %v730, 0.01
    %v735 = vsel %vm733, %v730, %v734
    %vm736 = vcmask 123904
    %737 = vst.msk [vmem:[#allocation4] sm:$0x3] %vm736, %v735
    // Predicated region
    $region58: #{epic_projection.1} parent=1 // pred_check
      _
    $region59: #{epic_projection.1} parent=1 // pred_check_branch
      %739 = sbr.rel (0) target = $region61
    $region60: #{epic_projection.1} parent=1 // pred_region
      %s741 = ssub.s32 256, 256
      %742 = vsyncadd [#allocation3], %s741
      %s743 = sshll.u32 [#allocation2], 4
      %s744 = int_to_ptr.vmem [resolvable:$true] %s743
      %749 = dma.vmem_to_hbm [thread:$0]  %s744, 256, %s14, [#allocation3], 128, 128, 8
    $region61: #{epic_projection.1} parent=1 // pred_fallthru
      _
    // Predicated region
    $region62: #{epic_projection.1} parent=1 // pred_check
      _
    $region63: #{epic_projection.1} parent=1 // pred_check_branch
      %751 = sbr.rel (0) target = $region65
    $region64: #{epic_projection.1} parent=1 // pred_region
      %s753 = ssub.s32 32, 32
      %754 = vsyncadd [#allocation5], %s753
      %s756 = sshll.u32 [#allocation4], 4
      %s757 = int_to_ptr.vmem [resolvable:$true] %s756
      %759 = dma.vmem_to_hbm [thread:$0]  %s757, 32, %s15, [#allocation5]
    $region65: #{epic_projection.1} parent=1 // pred_fallthru
      _
    // Predicated region
    $region66: #{epic_projection.1} parent=1 // pred_check
      _
    $region67: #{epic_projection.1} parent=1 // pred_check_branch
      %761 = sbr.rel (0) target = $region69
    $region68: #{epic_projection.1} parent=1 // pred_region
      %762 = dma.done [#allocation3], 256
    $region69: #{epic_projection.1} parent=1 // pred_fallthru
      _
    // Predicated region
    $region70: #{epic_projection.1} parent=1 // pred_check
      _
    $region71: #{epic_projection.1} parent=1 // pred_check_branch
      %764 = sbr.rel (0) target = $region73
    $region72: #{epic_projection.1} parent=1 // pred_region
      %765 = dma.done [#allocation5], 32
    $region73: #{epic_projection.1} parent=1 // pred_fallthru
      _
    %766 = vsyncpa [#allocation3], 1
    %767 = vsyncpa [#allocation5], 1

</llo_original>
